<compile_context>
chip_gen: v5e
topology: v5e:2x2
jax: 0.10.0
libtpu: 0.0.40
codegen_flags: <defaults>
</compile_context>

<pallas_src>
import jax
import jax.numpy as jnp
from jax.experimental import pallas as pl
from jax.experimental.pallas import tpu as pltpu


def _make_scse_kernel(n_groups, seg_len):
    """n_groups: channel groups folded onto the lane axis (power of 2, >=1).
    seg_len: lane width of one group segment (= HW when folded)."""
    n_steps = max(0, n_groups.bit_length() - 1)  # log2(n_groups)

    def kernel(x_ref, cse_ref, ws_ref, bs_ref, o_ref):
        # x block: (nb, Cg, L) -- channels on sublanes, pixels (x groups) on lanes.
        x = x_ref[...]                                    # native dtype (f32 or bf16)

        # ---- sSE branch: per-pixel 1x1 conv C -> 1, sigmoid ----
        # Product in x's dtype (bf16 stays bf16 on v6e/v7x VALU); channel
        # reduction over the sublane axis accumulates in f32.
        prod = x * ws_ref[...]                            # (nb, Cg, L)
        s = jnp.sum(prod, axis=1, keepdims=True, dtype=jnp.float32)   # (nb, 1, L)
        # When channel groups are folded onto lanes (HW < 128 case), finish the
        # channel reduction with a log2(k) rotate-and-add across lane segments.
        for i in range(n_steps):
            s = s + pltpu.roll(s, shift=seg_len * (1 << i), axis=2)
        sse = jax.nn.sigmoid(s + bs_ref[0])               # (nb, 1, L) f32

        # ---- combine: (sse + cse) * x, big ops in x's dtype ----
        scale = sse.astype(x.dtype) + cse_ref[...]        # (nb, Cg, L)
        o_ref[...] = x * scale

    return kernel


def _pick_hw_tile(HW, C, itemsize, target_block_bytes):
    """Largest lane-dense (multiple-of-128) HW tile within the block-byte target."""
    cols = (target_block_bytes // max(1, C * itemsize)) // 128 * 128
    cols = max(128, int(cols))
    return HW if HW <= cols else cols


def _pick_channel_fold(C, HW):
    """Smallest power-of-two k dividing C with (k*HW) % 128 == 0 (else 1)."""
    k = 1
    while k <= C:
        if C % k == 0 and (k * HW) % 128 == 0:
            return k
        k *= 2
    return 1


def _pick_batch_fold(N, per_image_block_bytes, target_block_bytes, n_tiles):
    """Largest divisor of N within the byte target; keep >=2 grid steps when N>1."""
    cap = max(1, target_block_bytes // max(1, per_image_block_bytes))
    if n_tiles == 1 and N > 1:
        cap = min(cap, max(1, N // 2))
    nb = 1
    for d in range(1, N + 1):
        if N % d == 0 and d <= cap:
            nb = d
    return nb


def scse_forward(x_nchw, params, hw_tile=None, target_block_bytes=4 << 20):
    """x_nchw: (N, C, H, W).  Returns (N, C, H, W)."""
    w1, b1, w2, b2, ws, bs = params
    N, C, H, W = x_nchw.shape
    HW = H * W
    itemsize = jnp.dtype(x_nchw.dtype).itemsize

    # NCHW -> (N, C, HW): contiguous merge, metadata only.
    x = x_nchw.reshape(N, C, HW)

    # ---- cSE gate precompute (tiny; plain XLA, f32 accumulation, no f32 x copy) ----
    pooled = jnp.mean(x, axis=-1, dtype=jnp.float32)       # (N, C)
    z1 = jnp.maximum(pooled @ w1 + b1, 0.0)                # (N, C//2)
    cse = jax.nn.sigmoid(z1 @ w2 + b2)                     # (N, C) f32

    # ---- layout selection ----
    if HW >= 128 or hw_tile is not None:
        k = 1
    else:
        k = _pick_channel_fold(C, HW)                      # lane-dense small-HW fold
    Cg = C // k

    if k == 1:
        if hw_tile is None:
            hw_tile = _pick_hw_tile(HW, C, itemsize, target_block_bytes)
        assert hw_tile == HW or hw_tile % 128 == 0, \
            "hw_tile must be full HW or a multiple of 128"
        lane = hw_tile
        n_tiles = pl.cdiv(HW, lane)
        x_in = x
        ws_in = ws.astype(x.dtype)                                         # (C, 1)
        cse_in = cse.reshape(N, C, 1).astype(x.dtype)                      # (N, C, 1)
    else:
        lane = k * HW
        n_tiles = 1
        x_in = x.reshape(N, Cg, lane)                                      # contiguous view
        ws_in = jnp.broadcast_to(ws.reshape(Cg, k, 1),
                                 (Cg, k, HW)).reshape(Cg, lane).astype(x.dtype)
        cse_in = jnp.broadcast_to(cse.reshape(N, Cg, k, 1),
                                  (N, Cg, k, HW)).reshape(N, Cg, lane).astype(x.dtype)

    per_img_block = Cg * lane * itemsize
    nb = _pick_batch_fold(N, per_img_block, target_block_bytes, n_tiles)
    grid = (N // nb, n_tiles)
    cse_lane = cse_in.shape[-1]
    ws_lane = ws_in.shape[-1]

    # VMEM budget from actual block sizes (double-buffered in + out), capped for v7x.
    x_block_bytes = nb * Cg * lane * itemsize
    cse_block_bytes = nb * Cg * cse_lane * jnp.dtype(cse_in.dtype).itemsize
    ws_block_bytes = Cg * ws_lane * jnp.dtype(ws_in.dtype).itemsize
    need = 4 * x_block_bytes + 2 * cse_block_bytes + 2 * ws_block_bytes
    vmem_limit = int(min(48 << 20, max(32 << 20, 2 * need)))

    total_elems = N * C * HW
    cost = pl.CostEstimate(
        flops=4 * total_elems,
        transcendentals=N * HW,
        bytes_accessed=2 * total_elems * itemsize
        + cse_in.size * jnp.dtype(cse_in.dtype).itemsize
        + ws_in.size * jnp.dtype(ws_in.dtype).itemsize,
    )

    out = pl.pallas_call(
        _make_scse_kernel(k, HW),
        out_shape=jax.ShapeDtypeStruct(x_in.shape, x.dtype),
        grid=grid,
        in_specs=[
            pl.BlockSpec((nb, Cg, lane), lambda n, t: (n, 0, t)),      # x tile
            pl.BlockSpec((nb, Cg, cse_lane), lambda n, t: (n, 0, 0)),  # cSE gate
            pl.BlockSpec((Cg, ws_lane), lambda n, t: (0, 0)),          # sSE weights
            pl.BlockSpec(memory_space=pltpu.MemorySpace.SMEM),         # sSE bias scalar
        ],
        out_specs=pl.BlockSpec((nb, Cg, lane), lambda n, t: (n, 0, t)),
        compiler_params=pltpu.CompilerParams(
            dimension_semantics=("parallel", "parallel"),
            vmem_limit_bytes=vmem_limit,
        ),
        cost_estimate=cost,
    )(x_in, cse_in, ws_in, bs.reshape(1))

    # back to NCHW: contiguous inverse of the views above, metadata only.
    return out.reshape(N, C, H, W)


def scse_reference(x_nchw, params):
    """Pure-JAX reference mirroring the PyTorch module semantics (NCHW)."""
    w1, b1, w2, b2, ws, bs = params
    xf = x_nchw.astype(jnp.float32)
    pooled = jnp.mean(xf, axis=(2, 3))                      # (N, C)
    z1 = jnp.maximum(pooled @ w1 + b1, 0.0)
    cse = jax.nn.sigmoid(z1 @ w2 + b2)                      # (N, C)
    s = jnp.tensordot(xf, ws, axes=[[1], [0]]) + bs         # (N, H, W, 1)
    sse = jnp.moveaxis(jax.nn.sigmoid(s), -1, 1)            # (N, 1, H, W)
    out = sse * xf + cse[:, :, None, None] * xf
    return out.astype(x_nchw.dtype)


def init_params(key, in_channels):
    C = in_channels
    Cr = C // 2
    k1, k2, k3, k4, k5, k6 = jax.random.split(key, 6)
    # 1x1 conv weights stored pre-transposed as (in, out) for x @ W matmuls.
    w1 = jax.random.normal(k1, (C, Cr), jnp.float32) * 0.1   # conv C -> C//2
    b1 = jax.random.normal(k2, (1, Cr), jnp.float32) * 0.1
    w2 = jax.random.normal(k3, (Cr, C), jnp.float32) * 0.1   # conv C//2 -> C
    b2 = jax.random.normal(k4, (1, C), jnp.float32) * 0.1
    ws = jax.random.normal(k5, (C, 1), jnp.float32) * 0.1    # conv C -> 1
    bs = jax.random.normal(k6, (1, 1), jnp.float32) * 0.1
    return (w1, b1, w2, b2, ws, bs)


if __name__ == "__main__":
    key = jax.random.PRNGKey(0)
    kx, kp, kx2, kp2 = jax.random.split(key, 4)

    # NOTE: the PyTorch module ignores `reduction` and uses C // 2.

    # 1) Standard case: HW >= 128, f32, auto-picked (~4 MiB target) tile.
    N, C, H, W = 2, 4, 16, 16
    x = jax.random.normal(kx, (N, C, H, W), jnp.float32)
    params = init_params(kp, C)
    ref = scse_reference(x, params)
    out = jax.block_until_ready(scse_forward(x, params))
    assert out.shape == (N, C, H, W)
    assert jnp.allclose(out, ref, atol=1e-5, rtol=1e-5), "mismatch (auto tile, f32)"

    # 2) Multi-tile (N, HW_tiles) grid path.
    out_t = jax.block_until_ready(scse_forward(x, params, hw_tile=128))
    assert jnp.allclose(out_t, ref, atol=1e-5, rtol=1e-5), "mismatch (hw tiled, f32)"

    # 3) bf16 path: bf16 elementwise chain with f32 accumulation (dtype-appropriate tol).
    xb = x.astype(jnp.bfloat16)
    out_b = jax.block_until_ready(scse_forward(xb, params))
    ref_b = scse_reference(xb, params).astype(jnp.float32)
    assert jnp.allclose(out_b.astype(jnp.float32), ref_b, atol=0.1, rtol=0.1), \
        "mismatch (bf16)"

    # 4) Small feature map (HW < 128): channel-group fold onto lanes + batch fold.
    N2, C2, H2, W2 = 4, 8, 8, 8
    x2 = jax.random.normal(kx2, (N2, C2, H2, W2), jnp.float32)
    params2 = init_params(kp2, C2)
    ref2 = scse_reference(x2, params2)
    out2 = jax.block_until_ready(scse_forward(x2, params2))
    assert jnp.allclose(out2, ref2, atol=1e-5, rtol=1e-5), "mismatch (small-HW fold)"

    print("KERNEL_OK")
</pallas_src>

<mosaic_0001>
module attributes {stable_mosaic.version = 11 : i64} {
  func.func @kernel(%arg0: i32, %arg1: i32, %arg2: memref<1x4x256xf32, #tpu.memory_space<vmem>>, %arg3: memref<1x4x1xf32, #tpu.memory_space<vmem>>, %arg4: memref<4x1xf32, #tpu.memory_space<vmem>>, %arg5: memref<1xf32, #tpu.memory_space<smem>>, %arg6: memref<1x4x256xf32, #tpu.memory_space<vmem>>) attributes {dimension_semantics = [#tpu.dimension_semantics<parallel>, #tpu.dimension_semantics<parallel>], iteration_bounds = array<i64: 2, 1>, scalar_prefetch = 0 : i64, scratch_operands = 0 : i64, tpu.core_type = #tpu.core_type<tc>, window_params = [{transform_indices = @transform_0, window_bounds = array<i64: 1, 4, 256>}, {transform_indices = @transform_1, window_bounds = array<i64: 1, 4, 1>}, {pipeline_mode = #tpu.pipeline_mode<synchronous>, transform_indices = @transform_2, window_bounds = array<i64: 4, 1>}, {transform_indices = @transform_3, window_bounds = array<i64: 1>}, {transform_indices = @transform_4, window_bounds = array<i64: 1, 4, 256>}]} {
    %c0 = arith.constant 0 : index
    %c0_0 = arith.constant 0 : index
    %c0_1 = arith.constant 0 : index
    %0 = vector.load %arg2[%c0, %c0_0, %c0_1] : memref<1x4x256xf32, #tpu.memory_space<vmem>>, vector<1x4x256xf32>
    %c0_2 = arith.constant 0 : index
    %c0_3 = arith.constant 0 : index
    %1 = vector.load %arg4[%c0_2, %c0_3] : memref<4x1xf32, #tpu.memory_space<vmem>>, vector<4x1xf32>
    %2 = vector.shape_cast %1 : vector<4x1xf32> to vector<1x4x1xf32>
    %3 = vector.broadcast %2 : vector<1x4x1xf32> to vector<1x4x256xf32>
    %4 = arith.mulf %0, %3 : vector<1x4x256xf32>
    %cst = arith.constant dense<0.000000e+00> : vector<1x256xf32>
    %5 = vector.multi_reduction <add>, %4, %cst [1] : vector<1x4x256xf32> to vector<1x256xf32>
    %6 = vector.shape_cast %5 : vector<1x256xf32> to vector<1x1x256xf32>
    %c0_4 = arith.constant 0 : index
    %7 = memref.load %arg5[%c0_4] : memref<1xf32, #tpu.memory_space<smem>>
    %8 = vector.broadcast %7 : f32 to vector<1x1x256xf32>
    %9 = arith.addf %6, %8 : vector<1x1x256xf32>
    %10 = arith.negf %9 : vector<1x1x256xf32>
    %11 = math.exp %10 : vector<1x1x256xf32>
    %cst_5 = arith.constant 1.000000e+00 : f32
    %12 = vector.broadcast %cst_5 : f32 to vector<1x1x256xf32>
    %13 = arith.addf %12, %11 : vector<1x1x256xf32>
    %14 = arith.divf %12, %13 : vector<1x1x256xf32>
    %c0_6 = arith.constant 0 : index
    %c0_7 = arith.constant 0 : index
    %c0_8 = arith.constant 0 : index
    %15 = vector.load %arg3[%c0_6, %c0_7, %c0_8] : memref<1x4x1xf32, #tpu.memory_space<vmem>>, vector<1x4x1xf32>
    %16 = vector.broadcast %14 : vector<1x1x256xf32> to vector<1x4x256xf32>
    %17 = vector.broadcast %15 : vector<1x4x1xf32> to vector<1x4x256xf32>
    %18 = arith.addf %16, %17 : vector<1x4x256xf32>
    %19 = arith.mulf %0, %18 : vector<1x4x256xf32>
    %c0_9 = arith.constant 0 : index
    %c0_10 = arith.constant 0 : index
    %c0_11 = arith.constant 0 : index
    %20 = vector.load %arg6[%c0_9, %c0_10, %c0_11] : memref<1x4x256xf32, #tpu.memory_space<vmem>>, vector<1x4x256xf32>
    tpu.vector_store %arg6[%c0_9, %c0_10, %c0_11], %19 {strides = array<i32>} : memref<1x4x256xf32, #tpu.memory_space<vmem>>, vector<1x4x256xf32>,
    return
  }
  func.func @transform_0(%arg0: i32, %arg1: i32) -> (i32, i32, i32) {
    %c0_i32 = arith.constant 0 : i32
    %c0_i32_0 = arith.constant 0 : i32
    return %arg0, %c0_i32, %arg1 : i32, i32, i32
  }
  func.func @transform_1(%arg0: i32, %arg1: i32) -> (i32, i32, i32) {
    %c0_i32 = arith.constant 0 : i32
    %c0_i32_0 = arith.constant 0 : i32
    %c0_i32_1 = arith.constant 0 : i32
    return %arg0, %c0_i32, %c0_i32_0 : i32, i32, i32
  }
  func.func @transform_2(%arg0: i32, %arg1: i32) -> (i32, i32) {
    %c0_i32 = arith.constant 0 : i32
    %c0_i32_0 = arith.constant 0 : i32
    %c0_i32_1 = arith.constant 0 : i32
    return %c0_i32, %c0_i32_0 : i32, i32
  }
  func.func @transform_3(%arg0: i32, %arg1: i32) -> i32 {
    %c0_i32 = arith.constant 0 : i32
    %c0_i32_0 = arith.constant 0 : i32
    return %c0_i32 : i32
  }
  func.func @transform_4(%arg0: i32, %arg1: i32) -> (i32, i32, i32) {
    %c0_i32 = arith.constant 0 : i32
    %c0_i32_0 = arith.constant 0 : i32
    return %arg0, %c0_i32, %arg1 : i32, i32, i32
  }
}

</mosaic_0001>

<llo_original>
// kernel: tpu_custom_call.1
$region0: #{tpu_custom_call.1}
  #allocation0 [shape = 'u32[]', space=smem, size = 0x4, offset = 0x4, fixed_abs, tag = 'smem constant byte address 0x4 - core index']
  #allocation1 [shape = 'u32[72,128]{1,0:T(1,128)}', space=vmem, size = 0x9000, scoped, tag = 'internal scratch']
  #allocation2 [shape = 'f32[1]{0:T(128)S(6)}', space=smem, size = 0x200, scoped, tag = 'scoped memory for tpu_custom_call.1']
  %s0 = inlined_call_operand.vmem [shape: f32[2,4,256], index: 0, kind: input, shape index: {}]
  %s1 = inlined_call_operand.vmem [shape: f32[2,4,1], index: 1, kind: input, shape index: {}]
  %s2 = inlined_call_operand.vmem [shape: f32[4,1], index: 2, kind: input, shape index: {}]
  %s3 = inlined_call_operand.<no memory space> [shape: f32[1], index: 3, kind: input, shape index: {}]
  %s4 = inlined_call_operand.hbm [shape: f32[2,4,256], index: 4, kind: output, shape index: {}]
  %s5 = sld [smem:[#allocation0]]
  $region49: #{tpu_custom_call.1} parent=0
    _
  %s7 = ssub.s32 1, %s5
  %s8 = scalar_select 0, %s7, %s5
  %9 = sst [smem:[#allocation2]] %s3
  $region1: #{tpu_custom_call.1} parent=0
    #allocation3 [shape = 'u8[8192]{0}', space=vmem, size = 0x2000, scoped, tag = 'output window, operand 0']
    #allocation4 [shape = 's32[2]{0}', space=sflag, size = 0x8, scoped, tag = 'scoped memory for tpu_custom_call.1']
    %10 = vsyncpa [#allocation4], 0
    %s11 = scalar_lea.sflag [#allocation4], 1
    %12 = vsyncpa %s11, 0
    loop: start=0, step=1, limit=4
    $region2: #{tpu_custom_call.1} parent=1 // loop_pre_header
      _
    $region3: #{tpu_custom_call.1} parent=1 // loop_header
      %s14 = sphi 0, %s18
      %p15 = scmp.ge.s32.totalorder %s14, 4
      %s21 = sphi 0, %s33
      %s22 = sphi 0, %s29
      %s23 = sphi 0, %s21
      %s24 = sphi 0, %s22
      %s25 = sphi 0, %s23
      %s26 = sphi 0, %s24
      %s38 = sphi 0, %s40
      %s41 = sphi 0, %s38
      %s42 = sphi 0, %s41
      %s58 = sphi 0, %s42
      %s64 = sphi 0, %s66
      %s67 = sphi 0, %s64
      %s68 = sphi 0, %s67
      %s84 = sphi 0, %s68
      %s88 = sphi 0, %s88
      %s90 = sphi 0, %s88
      %s91 = sphi 0, %s90
      %s105 = sphi 0, %s91
      %s109 = sphi 0, %s109
      %s111 = sphi 0, %s109
      %s112 = sphi 0, %s111
      %s126 = sphi 0, %s112
      %s134 = sphi 0, %s136
      %s137 = sphi 0, %s134
      %s138 = sphi 0, %s137
      %s154 = sphi 0, %s138
    $region4: #{tpu_custom_call.1} parent=1 // loop_header_branch
      %17 = sbr.rel (%p15) target = $region8
    $region5: #{tpu_custom_call.1} parent=1 // loop_body
      %s19 = ssub.s32 %s14, 1
      %s20 = ssub.s32 %s14, 2
      %s27 = sadd.s32 1, %s22
      %p28 = scmp.ge.s32.totalorder %s27, 1
      %s29 = scalar_select %p28, 0, %s27
      %s30 = sadd.s32 1, %s21
      %s31 = scalar_select %p28, %s30, %s21
      %p32 = scmp.ge.s32.totalorder %s31, 2
      %s33 = scalar_select %p32, 0, %s31
      %s34 = ssub.s32 %s21, %s33
      %s35 = ssub.s32 %s22, %s29
      %s36 = sor.u32 %s34, %s35
      %p37 = scmp.eq.s32.totalorder %s36, 0
      %s39 = sadd.s32 %s38, 1
      %s40 = scalar_select %p37, %s38, %s39
      %p43 = pneg %p37
      %p44 = scmp.eq.s32.totalorder %s14, 1
      %p45 = por %p43, %p44
      %p46 = scmp.ne.s32.totalorder %s38, %s41
      %p47 = scmp.eq.s32.totalorder %s14, 0
      %p48 = por %p46, %p47
      %p49 = scmp.ne.s32.totalorder %s38, %s41
      %p50 = scmp.eq.s32.totalorder %s19, 1
      %p51 = por %p49, %p50
      %p52 = scmp.ne.s32.totalorder %s41, %s42
      %p53 = scmp.eq.s32.totalorder %s19, 0
      %p54 = por %p52, %p53
      %p55 = scmp.ne.s32.totalorder %s41, %s42
      %p56 = scmp.eq.s32.totalorder %s20, 1
      %p57 = por %p55, %p56
      %p59 = scmp.ne.s32.totalorder %s42, %s58
      %p60 = scmp.eq.s32.totalorder %s20, 0
      %p61 = por %p59, %p60
      %s62 = ssub.s32 %s21, %s33
      %p63 = scmp.eq.s32.totalorder %s62, 0
      %s65 = sadd.s32 %s64, 1
      %s66 = scalar_select %p63, %s64, %s65
      %p69 = pneg %p63
      %p70 = scmp.eq.s32.totalorder %s14, 1
      %p71 = por %p69, %p70
      %p72 = scmp.ne.s32.totalorder %s64, %s67
      %p73 = scmp.eq.s32.totalorder %s14, 0
      %p74 = por %p72, %p73
      %p75 = scmp.ne.s32.totalorder %s64, %s67
      %p76 = scmp.eq.s32.totalorder %s19, 1
      %p77 = por %p75, %p76
      %p78 = scmp.ne.s32.totalorder %s67, %s68
      %p79 = scmp.eq.s32.totalorder %s19, 0
      %p80 = por %p78, %p79
      %p81 = scmp.ne.s32.totalorder %s67, %s68
      %p82 = scmp.eq.s32.totalorder %s20, 1
      %p83 = por %p81, %p82
      %p85 = scmp.ne.s32.totalorder %s68, %s84
      %p86 = scmp.eq.s32.totalorder %s20, 0
      %p87 = por %p85, %p86
      %s89 = sadd.s32 %s88, 1
      %p92 = scmp.eq.s32.totalorder %s14, 1
      %p93 = scmp.ne.s32.totalorder %s88, %s90
      %p94 = scmp.eq.s32.totalorder %s14, 0
      %p95 = por %p93, %p94
      %p96 = scmp.ne.s32.totalorder %s88, %s90
      %p97 = scmp.eq.s32.totalorder %s19, 1
      %p98 = por %p96, %p97
      %p99 = scmp.ne.s32.totalorder %s90, %s91
      %p100 = scmp.eq.s32.totalorder %s19, 0
      %p101 = por %p99, %p100
      %p102 = scmp.ne.s32.totalorder %s90, %s91
      %p103 = scmp.eq.s32.totalorder %s20, 1
      %p104 = por %p102, %p103
      %p106 = scmp.ne.s32.totalorder %s91, %s105
      %p107 = scmp.eq.s32.totalorder %s20, 0
      %p108 = por %p106, %p107
      %s110 = sadd.s32 %s109, 1
      %p113 = scmp.eq.s32.totalorder %s14, 1
      %p114 = scmp.ne.s32.totalorder %s109, %s111
      %p115 = scmp.eq.s32.totalorder %s14, 0
      %p116 = por %p114, %p115
      %p117 = scmp.ne.s32.totalorder %s109, %s111
      %p118 = scmp.eq.s32.totalorder %s19, 1
      %p119 = por %p117, %p118
      %p120 = scmp.ne.s32.totalorder %s111, %s112
      %p121 = scmp.eq.s32.totalorder %s19, 0
      %p122 = por %p120, %p121
      %p123 = scmp.ne.s32.totalorder %s111, %s112
      %p124 = scmp.eq.s32.totalorder %s20, 1
      %p125 = por %p123, %p124
      %p127 = scmp.ne.s32.totalorder %s112, %s126
      %p128 = scmp.eq.s32.totalorder %s20, 0
      %p129 = por %p127, %p128
      %s130 = ssub.s32 %s21, %s33
      %s131 = ssub.s32 %s22, %s29
      %s132 = sor.u32 %s130, %s131
      %p133 = scmp.eq.s32.totalorder %s132, 0
      %s135 = sadd.s32 %s134, 1
      %s136 = scalar_select %p133, %s134, %s135
      %p139 = pneg %p133
      %p140 = scmp.eq.s32.totalorder %s14, 1
      %p141 = por %p139, %p140
      %p142 = scmp.ne.s32.totalorder %s134, %s137
      %p143 = scmp.eq.s32.totalorder %s14, 0
      %p144 = por %p142, %p143
      %p145 = scmp.ne.s32.totalorder %s134, %s137
      %p146 = scmp.eq.s32.totalorder %s19, 1
      %p147 = por %p145, %p146
      %p148 = scmp.ne.s32.totalorder %s137, %s138
      %p149 = scmp.eq.s32.totalorder %s19, 0
      %p150 = por %p148, %p149
      %p151 = scmp.ne.s32.totalorder %s137, %s138
      %p152 = scmp.eq.s32.totalorder %s20, 1
      %p153 = por %p151, %p152
      %p155 = scmp.ne.s32.totalorder %s138, %s154
      %p156 = scmp.eq.s32.totalorder %s20, 0
      %p157 = por %p155, %p156
      %p158 = scmp.le.s32.totalorder 1, %s14
      %p159 = scmp.lt.s32.totalorder %s14, 3
      %p160 = pnand %p158, %p159
      %p161 = pneg %p160
      // Predicated region
      $region9: #{tpu_custom_call.1} parent=5 // pred_check
        _
      $region10: #{tpu_custom_call.1} parent=5 // pred_check_branch
        %163 = sbr.rel (%p160) target = $region12
      $region11: #{tpu_custom_call.1} parent=5 // pred_region
        %s164 = ssub.s32 %s14, 1
        // Predicated region
        $region13: #{tpu_custom_call.1} parent=11 // pred_check
          %p165 = pneg %p101
        $region14: #{tpu_custom_call.1} parent=11 // pred_check_branch
          %167 = sbr.rel (%p165) target = $region16
        $region15: #{tpu_custom_call.1} parent=11 // pred_region
          _
        $region16: #{tpu_custom_call.1} parent=11 // pred_fallthru
          _
        // Predicated region
        $region17: #{tpu_custom_call.1} parent=11 // pred_check
          %p168 = pneg %p122
        $region18: #{tpu_custom_call.1} parent=11 // pred_check_branch
          %170 = sbr.rel (%p168) target = $region20
        $region19: #{tpu_custom_call.1} parent=11 // pred_region
          _
        $region20: #{tpu_custom_call.1} parent=11 // pred_fallthru
          _
      $region12: #{tpu_custom_call.1} parent=5 // pred_fallthru
        _
      %p171 = scmp.lt.s32.totalorder %s14, 2
      // Predicated region
      $region21: #{tpu_custom_call.1} parent=5 // pred_check
        %p172 = pneg %p171
      $region22: #{tpu_custom_call.1} parent=5 // pred_check_branch
        %174 = sbr.rel (%p172) target = $region24
      $region23: #{tpu_custom_call.1} parent=5 // pred_region
        // Predicated region
        $region25: #{tpu_custom_call.1} parent=23 // pred_check
          %p175 = pneg %p48
        $region26: #{tpu_custom_call.1} parent=23 // pred_check_branch
          %177 = sbr.rel (%p175) target = $region28
        $region27: #{tpu_custom_call.1} parent=23 // pred_region
          %s178 = smul.u32 2, %s22
          %p179 = scmp.lt.s32.totalorder %s21, 1
          %s180 = scalar_select %p179, %s21, 1
          %p181 = scmp.lt.s32.totalorder %s178, 1
          %s182 = scalar_select %p181, %s178, 1
          %s183 = smul.addr %s180, 2
          %s184 = sadd.s32 %s182, %s183
          %s185 = smul.addr %s184, 4
          %s186 = scalar_lea.vmem %s0, %s185
          %s187 = smul.u32 2, %s22
        $region28: #{tpu_custom_call.1} parent=23 // pred_fallthru
          _
        // Predicated region
        $region29: #{tpu_custom_call.1} parent=23 // pred_check
          %p188 = pneg %p74
        $region30: #{tpu_custom_call.1} parent=23 // pred_check_branch
          %190 = sbr.rel (%p188) target = $region32
        $region31: #{tpu_custom_call.1} parent=23 // pred_region
          %p191 = scmp.lt.s32.totalorder %s21, 1
          %s192 = scalar_select %p191, %s21, 1
          %s193 = smul.addr %s192, 4
          %s194 = scalar_lea.vmem %s1, %s193
        $region32: #{tpu_custom_call.1} parent=23 // pred_fallthru
          _
      $region24: #{tpu_custom_call.1} parent=5 // pred_fallthru
        _
      %p195 = scmp.le.s32.totalorder 1, %s14
      %p196 = scmp.lt.s32.totalorder %s14, 3
      %p197 = pnand %p195, %p196
      %p198 = pneg %p197
      // Predicated region
      $region33: #{tpu_custom_call.1} parent=5 // pred_check
        _
      $region34: #{tpu_custom_call.1} parent=5 // pred_check_branch
        %200 = sbr.rel (%p197) target = $region36
      $region35: #{tpu_custom_call.1} parent=5 // pred_region
        %s201 = ssub.s32 %s14, 1
        %s202 = smul.u32 2, %s24
        %p203 = scmp.lt.s32.totalorder %s23, 1
        %s204 = scalar_select %p203, %s23, 1
        %p205 = scmp.lt.s32.totalorder %s202, 1
        %s206 = scalar_select %p205, %s202, 1
        %s207 = smul.addr %s204, 2
        %s208 = sadd.s32 %s206, %s207
        %s209 = smul.addr %s208, 4
        %s210 = scalar_lea.vmem %s0, %s209
        %p211 = pneg %p54
        %p212 = pneg %p51
        %p213 = scmp.lt.s32.totalorder %s23, 1
        %s214 = scalar_select %p213, %s23, 1
        %s215 = smul.addr %s214, 4
        %s216 = scalar_lea.vmem %s1, %s215
        %p217 = pneg %p80
        %p218 = pneg %p77
        %p219 = pneg %p101
        %p220 = pneg %p98
        %p221 = pneg %p122
        %p222 = pneg %p119
        %p223 = pneg %p150
        %p224 = pneg %p147
        %s225 = sand.u32 %s137, 1
        %s226 = scalar_lea.sflag [#allocation4], %s225
        %s227 = sand.u32 %s137, 1
        %s228 = smul.addr %s227, 8
        %s229 = scalar_lea.vmem [#allocation3], %s228
        %s230 = smul.u32 2, %s24
        %p231 = scmp.lt.s32.totalorder %s23, 1
        %s232 = scalar_select %p231, %s23, 1
        %p233 = scmp.lt.s32.totalorder %s230, 1
        %s234 = scalar_select %p233, %s230, 1
        %s235 = smul.addr %s232, 2
        %s236 = sadd.s32 %s234, %s235
        %s237 = smul.addr %s236, 4
        %s238 = scalar_lea.vmem %s0, %s237
        %s239 = smul.u32 2, %s24
        %p240 = scmp.lt.s32.totalorder %s23, 1
        %s241 = scalar_select %p240, %s23, 1
        %s242 = smul.addr %s241, 4
        %s243 = scalar_lea.vmem %s1, %s242
        %s244 = smul.u32 2, %s24
        %v245 = vld [vmem:[%s238] sm:$0xff]
        %v246 = vld [vmem:[%s2] sm:$0xf]
        %248 = vset.pattern.permute.xlu0 0
        %249 = vperm.xlu0 %248, %v246
        %v250 = vpop.permute.xlu0 %249
        %v252 = vunpack.c.l.s4 839922192
        %v253 = vunpack.c.0.s8 %v252
        %v254 = vperm.slane %v250, %v253
        %v256 = vmul.f32 %v245, %v254
        %258 = vst [vmem:[#allocation1] ss:$2 sm:$0xff] %v256
        %v259 = vld.sshfl [vmem:[#allocation1] sm:$0xff pattern:$0x75316420]
        %v260 = vld.sshfl [vmem:[#allocation1 + $0x8] sm:$0xff pattern:$0x75316420]
        %vm263 = vcmask 1043456
        %v264 = vsel %vm263, %v259, 0.0
        %v265 = vrot.slane %v264, 4
        %v266 = vadd.f32 %v264, %v265
        %v267 = vrot.slane %v266, 2
        %v268 = vadd.f32 %v266, %v267
        %v269 = vrot.slane %v268, 1
        %v270 = vadd.f32 %v268, %v269
        %v271 = vsel %vm263, %v260, 0.0
        %v272 = vrot.slane %v271, 4
        %v273 = vadd.f32 %v271, %v272
        %v274 = vrot.slane %v273, 2
        %v275 = vadd.f32 %v273, %v274
        %v276 = vrot.slane %v275, 1
        %v277 = vadd.f32 %v275, %v276
        %s278 = sld [smem:[#allocation2]]
        %v279 = vstv %s278
        %v280 = vadd.f32 %v270, %v279
        %v281 = vadd.f32 %v277, %v279
        %v282 = vxor.u32 %v280, 2147483648
        %v283 = vxor.u32 %v281, 2147483648
        %v284 = vmul.f32 %v282, 1.442695
        %v285 = vpow.pop %v284
        %v286 = vmul.f32 %v283, 1.442695
        %v287 = vpow.pop %v286
        %v288 = vadd.f32 %v285, 1.0
        %v289 = vadd.f32 %v287, 1.0
        %v290 = vrcp.pop %v288
        %v291 = vmul.f32 %v288, %v290
        %v292 = vsub.f32 1.0, %v291
        %v293 = vmul.f32 %v290, %v292
        %v294 = vadd.f32 %v290, %v293
        %vm295 = vweird.f32 %v288
        %vm296 = vweird.f32 %v290
        %vm297 = vmor %vm295, %vm296
        %v298 = vsel %vm297, %v290, %v294
        %v299 = vand.u32 2147483647, %v288
        %vm300 = vcmp.eq.f32.partialorder %v299, 8.507059e+37
        %v301 = vand.u32 %v288, 2147483648
        %v302 = vor.u32 1.1754944e-38, %v301
        %v303 = vsel %vm300, %v302, %v298
        %v304 = vmul.f32 1.0, %v303
        %v305 = vrcp.pop %v289
        %v306 = vmul.f32 %v289, %v305
        %v307 = vsub.f32 1.0, %v306
        %v308 = vmul.f32 %v305, %v307
        %v309 = vadd.f32 %v305, %v308
        %vm310 = vweird.f32 %v289
        %vm311 = vweird.f32 %v305
        %vm312 = vmor %vm310, %vm311
        %v313 = vsel %vm312, %v305, %v309
        %v314 = vand.u32 2147483647, %v289
        %vm315 = vcmp.eq.f32.partialorder %v314, 8.507059e+37
        %v316 = vand.u32 %v289, 2147483648
        %v317 = vor.u32 1.1754944e-38, %v316
        %v318 = vsel %vm315, %v317, %v313
        %v319 = vmul.f32 1.0, %v318
        %v320 = vld [vmem:[%s243] sm:$0xf]
        %322 = vset.pattern.permute.xlu0 0
        %323 = vperm.xlu0 %322, %v320
        %v324 = vpop.permute.xlu0 %323
        %v326 = vadd.f32 %v304, %v324
        %v327 = vadd.f32 %v319, %v324
        %v330 = vrot.slane %v327, 4
        %v331 = vsel %vm263, %v326, %v330
        %v333 = vmul.f32 %v245, %v331
        %334 = vst [vmem:[%s229] sm:$0xff] %v333
        %s335 = sand.u32 %s137, 1
        %s336 = scalar_lea.sflag [#allocation4], %s335
        %s337 = sand.u32 %s137, 1
        %s338 = smul.addr %s337, 8
        %s339 = scalar_lea.vmem [#allocation3], %s338
        // Predicated region
        $region37: #{tpu_custom_call.1} parent=35 // pred_check
          %p340 = pneg %p147
        $region38: #{tpu_custom_call.1} parent=35 // pred_check_branch
          %342 = sbr.rel (%p340) target = $region40
        $region39: #{tpu_custom_call.1} parent=35 // pred_region
          %s343 = smul.u32 2, %s24
          %345 = vsyncadd %s336, 0
          %s346 = smul.addr %s23, 2
          %s347 = sadd.s32 %s343, %s346
          %s348 = smul.addr %s347, 4
          %s349 = scalar_lea.hbm %s4, %s348
          %s351 = sshll.u32 %s339, 4
          %s352 = int_to_ptr.vmem [resolvable:$true] %s351
          %s353 = sshll.u32 %s349, 4
          %s354 = int_to_ptr.hbm [resolvable:$true] %s353
          %356 = dma.vmem_to_hbm [thread:$0]  %s352, 128, %s354, %s336
        $region40: #{tpu_custom_call.1} parent=35 // pred_fallthru
          _
      $region36: #{tpu_custom_call.1} parent=5 // pred_fallthru
        _
      %p357 = scmp.le.s32.totalorder 2, %s14
      // Predicated region
      $region41: #{tpu_custom_call.1} parent=5 // pred_check
        %p358 = pneg %p357
      $region42: #{tpu_custom_call.1} parent=5 // pred_check_branch
        %360 = sbr.rel (%p358) target = $region44
      $region43: #{tpu_custom_call.1} parent=5 // pred_region
        %s361 = ssub.s32 %s14, 2
        // Predicated region
        $region45: #{tpu_custom_call.1} parent=43 // pred_check
          %p362 = pneg %p153
        $region46: #{tpu_custom_call.1} parent=43 // pred_check_branch
          %364 = sbr.rel (%p362) target = $region48
        $region47: #{tpu_custom_call.1} parent=43 // pred_region
          %s365 = sand.u32 %s138, 1
          %s366 = scalar_lea.sflag [#allocation4], %s365
          %s367 = sand.u32 %s138, 1
          %s368 = smul.addr %s367, 8
          %s369 = scalar_lea.vmem [#allocation3], %s368
          %371 = dma.done %s366, 128
        $region48: #{tpu_custom_call.1} parent=43 // pred_fallthru
          _
      $region44: #{tpu_custom_call.1} parent=5 // pred_fallthru
        _
    $region6: #{tpu_custom_call.1} parent=1 // loop_footer
      %s18 = sadd.s32 1, %s14
    $region7: #{tpu_custom_call.1} parent=1 // loop_footer_branch
      %13 = sbr.rel target = $region3
    $region8: #{tpu_custom_call.1} parent=1 // loop_exit
      _
    %372 = vsyncpa [#allocation4], 1
    %s373 = scalar_lea.sflag [#allocation4], 1
    %374 = vsyncpa %s373, 1

</llo_original>
